<compile_context>
chip_gen: v7x
topology: tpu7x:2x2x1
jax: 0.10.0
libtpu: 0.0.40
codegen_flags: <defaults>
</compile_context>

<pallas_src>
import functools

import jax
import jax.numpy as jnp
from jax.experimental import pallas as pl
from jax.experimental.pallas import tpu as pltpu

HIDDEN = 20          # logical GCN hidden width (matches the PyTorch module)
HP = 128             # lane-padded hidden width (full vreg lane utilization)
CP = 128             # lane-padded class width (unmasked output stores)
BN_EPS = 1e-5


def _round_up(v, m):
    return (v + m - 1) // m * m


# ---------------------------------------------------------------------------
# Kernel
# ---------------------------------------------------------------------------
def node_gcn_kernel(a_ref, x_ref, w_ref, vec_ref, out_ref, *, fp):
    """Fused 3x(GCNConv + ReLU [+ BN]) + concat + Linear.

    a_ref   : [N, N]          bf16  normalized adjacency D^-1/2 (A+I) D^-1/2
    x_ref   : [N, fp]         bf16  node features, lane-padded
    w_ref   : [fp + 5*HP,128] bf16  packed weight slab:
                rows [0, fp)            -> W1  (zero-padded)
                rows [fp, fp+HP)        -> W2
                rows [fp+HP, fp+2HP)    -> W3
                rows [fp+2HP, fp+5HP)   -> Wl  (concat layout, zero-padded rows)
    vec_ref : [8, 128]        f32   rows 0..6 = b1,g1,be1,b2,g2,be2,b3 ; row 7 = bl
    out_ref : [N, CP]         f32
    """
    a = a_ref[...]
    x = x_ref[...]
    vec = vec_ref[...]
    b1, g1, be1 = vec[0:1], vec[1:2], vec[2:3]
    b2, g2, be2 = vec[3:4], vec[4:5], vec[5:6]
    b3, bl = vec[6:7], vec[7:8]

    # Static, bf16-tile-aligned slices of the packed weight slab (zero-cost views).
    w1 = w_ref[0:fp, :]
    w2 = w_ref[fp:fp + HP, :]
    w3 = w_ref[fp + HP:fp + 2 * HP, :]
    wl = w_ref[fp + 2 * HP:fp + 5 * HP, :]

    def gcn(h_in_bf16, w, b):
        # A_hat @ (H W) + b, ReLU.  Both matmuls bf16 on the MXU, f32 accumulate.
        hw = jnp.dot(h_in_bf16, w, preferred_element_type=jnp.float32)
        h = jnp.dot(a, hw.astype(jnp.bfloat16),
                    preferred_element_type=jnp.float32) + b
        return jnp.maximum(h, 0.0)

    def batch_norm(h, g, be):
        # Training-mode BN (biased variance), one pass over h, folded affine, f32.
        mean = jnp.mean(h, axis=0, keepdims=True)
        mean_sq = jnp.mean(h * h, axis=0, keepdims=True)
        var = jnp.maximum(mean_sq - mean * mean, 0.0)
        scale = g * jax.lax.rsqrt(var + BN_EPS)
        shift = be - mean * scale
        return h * scale + shift

    h1 = batch_norm(gcn(x, w1, b1), g1, be1)
    h1b = h1.astype(jnp.bfloat16)
    h2 = batch_norm(gcn(h1b, w2, b2), g2, be2)
    h2b = h2.astype(jnp.bfloat16)
    h3 = gcn(h2b, w3, b3)                 # no BatchNorm after relu3 (matches spec)
    h3b = h3.astype(jnp.bfloat16)

    # Single K = 3*HP matmul on the concatenated embedding (lane-aligned pieces).
    cat = jnp.concatenate([h1b, h2b, h3b], axis=1)        # [N, 3*HP]
    out_ref[...] = jnp.dot(cat, wl, preferred_element_type=jnp.float32) + bl


# ---------------------------------------------------------------------------
# Host-side glue (plain JAX)
# ---------------------------------------------------------------------------
def build_normalized_adjacency(edge_index, edge_weights, num_nodes):
    """Dense A_hat = D^-1/2 (A + I) D^-1/2, matching PyG GCNConv gcn_norm."""
    if edge_weights is None:
        edge_weights = jnp.ones((edge_index.shape[1],), jnp.float32)
    src = edge_index[0]
    dst = edge_index[1]
    a = jnp.zeros((num_nodes, num_nodes), jnp.float32).at[dst, src].add(edge_weights)
    # TODO(synk): PyG's add_remaining_self_loops only adds *missing* self loops;
    # we assume the input graph has none (true for the demo graph below).
    a = a + jnp.eye(num_nodes, dtype=jnp.float32)
    deg = jnp.sum(a, axis=1)
    dinv = jnp.where(deg > 0.0, jax.lax.rsqrt(deg), 0.0)
    return a * dinv[:, None] * dinv[None, :]


def init_params(key, num_features, num_classes):
    ks = jax.random.split(key, 8)
    return {
        "w1": jax.random.normal(ks[0], (num_features, HIDDEN), jnp.float32) * 0.2,
        "b1": jax.random.normal(ks[1], (HIDDEN,), jnp.float32) * 0.05,
        "g1": jnp.ones((HIDDEN,), jnp.float32),
        "be1": jnp.zeros((HIDDEN,), jnp.float32),
        "w2": jax.random.normal(ks[2], (HIDDEN, HIDDEN), jnp.float32) * 0.2,
        "b2": jax.random.normal(ks[3], (HIDDEN,), jnp.float32) * 0.05,
        "g2": jnp.ones((HIDDEN,), jnp.float32),
        "be2": jnp.zeros((HIDDEN,), jnp.float32),
        "w3": jax.random.normal(ks[4], (HIDDEN, HIDDEN), jnp.float32) * 0.2,
        "b3": jax.random.normal(ks[5], (HIDDEN,), jnp.float32) * 0.05,
        "wl": jax.random.normal(ks[6], (3 * HIDDEN, num_classes), jnp.float32) * 0.2,
        "bl": jax.random.normal(ks[7], (num_classes,), jnp.float32) * 0.05,
    }


def pack_params(params, num_features, num_classes):
    """Pack the 12 small tensors into one bf16 weight slab + one f32 vector slab."""
    fp = _round_up(num_features, 16)   # bf16 sublane-tile-aligned slab offsets
    f32 = jnp.float32

    w1p = jnp.zeros((fp, CP), f32).at[:num_features, :HIDDEN].set(params["w1"])
    w2p = jnp.zeros((HP, CP), f32).at[:HIDDEN, :HIDDEN].set(params["w2"])
    w3p = jnp.zeros((HP, CP), f32).at[:HIDDEN, :HIDDEN].set(params["w3"])
    wlp = (jnp.zeros((3 * HP, CP), f32)
           .at[0:HIDDEN, :num_classes].set(params["wl"][0:HIDDEN])
           .at[HP:HP + HIDDEN, :num_classes].set(params["wl"][HIDDEN:2 * HIDDEN])
           .at[2 * HP:2 * HP + HIDDEN, :num_classes].set(params["wl"][2 * HIDDEN:3 * HIDDEN]))
    w_slab = jnp.concatenate([w1p, w2p, w3p, wlp], axis=0).astype(jnp.bfloat16)

    vec = jnp.zeros((8, 128), f32)
    vec = vec.at[0, :HIDDEN].set(params["b1"])
    vec = vec.at[1, :HIDDEN].set(params["g1"])
    vec = vec.at[2, :HIDDEN].set(params["be1"])
    vec = vec.at[3, :HIDDEN].set(params["b2"])
    vec = vec.at[4, :HIDDEN].set(params["g2"])
    vec = vec.at[5, :HIDDEN].set(params["be2"])
    vec = vec.at[6, :HIDDEN].set(params["b3"])
    vec = vec.at[7, :num_classes].set(params["bl"])

    return {"w_slab": w_slab, "vec_slab": vec, "fp": fp, "num_classes": num_classes}


def node_gcn_forward(packed, x, edge_index, edge_weights=None):
    num_nodes, num_features = x.shape
    fp = packed["fp"]
    num_classes = packed["num_classes"]

    a_hat = build_normalized_adjacency(edge_index, edge_weights, num_nodes)
    a_bf16 = a_hat.astype(jnp.bfloat16)
    x_pad = jnp.zeros((num_nodes, fp), jnp.bfloat16).at[:, :num_features].set(
        x.astype(jnp.bfloat16))

    kernel = pl.pallas_call(
        functools.partial(node_gcn_kernel, fp=fp),
        out_shape=jax.ShapeDtypeStruct((num_nodes, CP), jnp.float32),
        compiler_params=pltpu.CompilerParams(vmem_limit_bytes=32 << 20),
    )
    out_pad = kernel(a_bf16, x_pad, packed["w_slab"], packed["vec_slab"])
    return out_pad[:, :num_classes]


# ---------------------------------------------------------------------------
# Demo
# ---------------------------------------------------------------------------
if __name__ == "__main__":
    key = jax.random.PRNGKey(0)
    k_x, k_p = jax.random.split(key)

    num_nodes = 12
    num_features = 16
    num_classes = 8

    # Node features.
    x = jax.random.normal(k_x, (num_nodes, num_features), jnp.float32)

    # Deterministic bidirectional ring graph, no self loops.
    fwd = jnp.arange(num_nodes, dtype=jnp.int32)
    nxt = (fwd + 1) % num_nodes
    edge_index = jnp.stack(
        [jnp.concatenate([fwd, nxt]), jnp.concatenate([nxt, fwd])], axis=0
    )  # [2, 2*num_nodes]
    edge_weights = None  # -> ones, like the PyTorch default

    # TODO(synk): BatchNorm eval-mode (running stats) parity is not implemented;
    # this matches the PyTorch module in training mode only.
    params = init_params(k_p, num_features, num_classes)
    packed = pack_params(params, num_features, num_classes)

    out = node_gcn_forward(packed, x, edge_index, edge_weights)
    out = jax.block_until_ready(out)
    assert out.shape == (num_nodes, num_classes)
    assert bool(jnp.all(jnp.isfinite(out)))
    print("KERNEL_OK")
</pallas_src>

<mosaic_0001>
module attributes {stable_mosaic.version = 11 : i64} {
  func.func @node_gcn_kernel(%arg0: memref<12x12xbf16, #tpu.memory_space<vmem>>, %arg1: memref<12x16xbf16, #tpu.memory_space<vmem>>, %arg2: memref<656x128xbf16, #tpu.memory_space<vmem>>, %arg3: memref<8x128xf32, #tpu.memory_space<vmem>>, %arg4: memref<12x128xf32, #tpu.memory_space<vmem>>) attributes {dimension_semantics = [], scalar_prefetch = 0 : i64, scratch_operands = 0 : i64, tpu.core_type = #tpu.core_type<tc>} {
    %c0 = arith.constant 0 : index
    %c0_0 = arith.constant 0 : index
    %0 = vector.load %arg0[%c0, %c0_0] : memref<12x12xbf16, #tpu.memory_space<vmem>>, vector<12x12xbf16>
    %c0_1 = arith.constant 0 : index
    %c0_2 = arith.constant 0 : index
    %1 = vector.load %arg1[%c0_1, %c0_2] : memref<12x16xbf16, #tpu.memory_space<vmem>>, vector<12x16xbf16>
    %c0_3 = arith.constant 0 : index
    %c0_4 = arith.constant 0 : index
    %2 = vector.load %arg3[%c0_3, %c0_4] : memref<8x128xf32, #tpu.memory_space<vmem>>, vector<8x128xf32>
    %3 = vector.extract_strided_slice %2 {offsets = [0, 0], sizes = [1, 128], strides = [1, 1]} : vector<8x128xf32> to vector<1x128xf32>
    %4 = vector.extract_strided_slice %2 {offsets = [1, 0], sizes = [1, 128], strides = [1, 1]} : vector<8x128xf32> to vector<1x128xf32>
    %5 = vector.extract_strided_slice %2 {offsets = [2, 0], sizes = [1, 128], strides = [1, 1]} : vector<8x128xf32> to vector<1x128xf32>
    %6 = vector.extract_strided_slice %2 {offsets = [3, 0], sizes = [1, 128], strides = [1, 1]} : vector<8x128xf32> to vector<1x128xf32>
    %7 = vector.extract_strided_slice %2 {offsets = [4, 0], sizes = [1, 128], strides = [1, 1]} : vector<8x128xf32> to vector<1x128xf32>
    %8 = vector.extract_strided_slice %2 {offsets = [5, 0], sizes = [1, 128], strides = [1, 1]} : vector<8x128xf32> to vector<1x128xf32>
    %9 = vector.extract_strided_slice %2 {offsets = [6, 0], sizes = [1, 128], strides = [1, 1]} : vector<8x128xf32> to vector<1x128xf32>
    %10 = vector.extract_strided_slice %2 {offsets = [7, 0], sizes = [1, 128], strides = [1, 1]} : vector<8x128xf32> to vector<1x128xf32>
    %c0_5 = arith.constant 0 : index
    %c0_6 = arith.constant 0 : index
    %11 = vector.load %arg2[%c0_5, %c0_6] : memref<656x128xbf16, #tpu.memory_space<vmem>>, vector<16x128xbf16>
    %c16 = arith.constant 16 : index
    %c0_7 = arith.constant 0 : index
    %12 = vector.load %arg2[%c16, %c0_7] : memref<656x128xbf16, #tpu.memory_space<vmem>>, vector<128x128xbf16>
    %c144 = arith.constant 144 : index
    %c0_8 = arith.constant 0 : index
    %13 = vector.load %arg2[%c144, %c0_8] : memref<656x128xbf16, #tpu.memory_space<vmem>>, vector<128x128xbf16>
    %c272 = arith.constant 272 : index
    %c0_9 = arith.constant 0 : index
    %14 = vector.load %arg2[%c272, %c0_9] : memref<656x128xbf16, #tpu.memory_space<vmem>>, vector<384x128xbf16>
    %cst = arith.constant dense<0.000000e+00> : vector<12x128xf32>
    %15 = tpu.matmul %1, %11, %cst {dimension_numbers = #tpu.dot_dimension_numbers<[1], [0], [0], [1], [0, 0, 1, 1], [], []>} : vector<12x16xbf16>, vector<16x128xbf16>, vector<12x128xf32> -> vector<12x128xf32>
    %16 = arith.truncf %15 : vector<12x128xf32> to vector<12x128xbf16>
    %cst_10 = arith.constant dense<0.000000e+00> : vector<12x128xf32>
    %17 = tpu.matmul %0, %16, %cst_10 {dimension_numbers = #tpu.dot_dimension_numbers<[1], [0], [0], [1], [0, 0, 1, 1], [], []>} : vector<12x12xbf16>, vector<12x128xbf16>, vector<12x128xf32> -> vector<12x128xf32>
    %18 = vector.broadcast %3 : vector<1x128xf32> to vector<12x128xf32>
    %19 = arith.addf %17, %18 : vector<12x128xf32>
    %cst_11 = arith.constant 0.000000e+00 : f32
    %20 = vector.broadcast %cst_11 : f32 to vector<12x128xf32>
    %21 = arith.maximumf %19, %20 : vector<12x128xf32>
    %cst_12 = arith.constant dense<0.000000e+00> : vector<128xf32>
    %22 = vector.multi_reduction <add>, %21, %cst_12 [0] : vector<12x128xf32> to vector<128xf32>
    %23 = vector.shape_cast %22 : vector<128xf32> to vector<1x128xf32>
    %cst_13 = arith.constant 1.200000e+01 : f32
    %24 = vector.broadcast %cst_13 : f32 to vector<1x128xf32>
    %25 = arith.divf %23, %24 : vector<1x128xf32>
    %26 = arith.mulf %21, %21 : vector<12x128xf32>
    %cst_14 = arith.constant dense<0.000000e+00> : vector<128xf32>
    %27 = vector.multi_reduction <add>, %26, %cst_14 [0] : vector<12x128xf32> to vector<128xf32>
    %28 = vector.shape_cast %27 : vector<128xf32> to vector<1x128xf32>
    %cst_15 = arith.constant 1.200000e+01 : f32
    %29 = vector.broadcast %cst_15 : f32 to vector<1x128xf32>
    %30 = arith.divf %28, %29 : vector<1x128xf32>
    %31 = arith.mulf %25, %25 : vector<1x128xf32>
    %32 = arith.subf %30, %31 : vector<1x128xf32>
    %cst_16 = arith.constant 0.000000e+00 : f32
    %33 = vector.broadcast %cst_16 : f32 to vector<1x128xf32>
    %34 = arith.maximumf %32, %33 : vector<1x128xf32>
    %cst_17 = arith.constant 9.99999974E-6 : f32
    %35 = vector.broadcast %cst_17 : f32 to vector<1x128xf32>
    %36 = arith.addf %34, %35 : vector<1x128xf32>
    %37 = math.rsqrt %36 : vector<1x128xf32>
    %38 = arith.mulf %4, %37 : vector<1x128xf32>
    %39 = arith.mulf %25, %38 : vector<1x128xf32>
    %40 = arith.subf %5, %39 : vector<1x128xf32>
    %41 = vector.broadcast %38 : vector<1x128xf32> to vector<12x128xf32>
    %42 = arith.mulf %21, %41 : vector<12x128xf32>
    %43 = vector.broadcast %40 : vector<1x128xf32> to vector<12x128xf32>
    %44 = arith.addf %42, %43 : vector<12x128xf32>
    %45 = arith.truncf %44 : vector<12x128xf32> to vector<12x128xbf16>
    %cst_18 = arith.constant dense<0.000000e+00> : vector<12x128xf32>
    %46 = tpu.matmul %45, %12, %cst_18 {dimension_numbers = #tpu.dot_dimension_numbers<[1], [0], [0], [1], [0, 0, 1, 1], [], []>} : vector<12x128xbf16>, vector<128x128xbf16>, vector<12x128xf32> -> vector<12x128xf32>
    %47 = arith.truncf %46 : vector<12x128xf32> to vector<12x128xbf16>
    %cst_19 = arith.constant dense<0.000000e+00> : vector<12x128xf32>
    %48 = tpu.matmul %0, %47, %cst_19 {dimension_numbers = #tpu.dot_dimension_numbers<[1], [0], [0], [1], [0, 0, 1, 1], [], []>} : vector<12x12xbf16>, vector<12x128xbf16>, vector<12x128xf32> -> vector<12x128xf32>
    %49 = vector.broadcast %6 : vector<1x128xf32> to vector<12x128xf32>
    %50 = arith.addf %48, %49 : vector<12x128xf32>
    %cst_20 = arith.constant 0.000000e+00 : f32
    %51 = vector.broadcast %cst_20 : f32 to vector<12x128xf32>
    %52 = arith.maximumf %50, %51 : vector<12x128xf32>
    %cst_21 = arith.constant dense<0.000000e+00> : vector<128xf32>
    %53 = vector.multi_reduction <add>, %52, %cst_21 [0] : vector<12x128xf32> to vector<128xf32>
    %54 = vector.shape_cast %53 : vector<128xf32> to vector<1x128xf32>
    %cst_22 = arith.constant 1.200000e+01 : f32
    %55 = vector.broadcast %cst_22 : f32 to vector<1x128xf32>
    %56 = arith.divf %54, %55 : vector<1x128xf32>
    %57 = arith.mulf %52, %52 : vector<12x128xf32>
    %cst_23 = arith.constant dense<0.000000e+00> : vector<128xf32>
    %58 = vector.multi_reduction <add>, %57, %cst_23 [0] : vector<12x128xf32> to vector<128xf32>
    %59 = vector.shape_cast %58 : vector<128xf32> to vector<1x128xf32>
    %cst_24 = arith.constant 1.200000e+01 : f32
    %60 = vector.broadcast %cst_24 : f32 to vector<1x128xf32>
    %61 = arith.divf %59, %60 : vector<1x128xf32>
    %62 = arith.mulf %56, %56 : vector<1x128xf32>
    %63 = arith.subf %61, %62 : vector<1x128xf32>
    %cst_25 = arith.constant 0.000000e+00 : f32
    %64 = vector.broadcast %cst_25 : f32 to vector<1x128xf32>
    %65 = arith.maximumf %63, %64 : vector<1x128xf32>
    %cst_26 = arith.constant 9.99999974E-6 : f32
    %66 = vector.broadcast %cst_26 : f32 to vector<1x128xf32>
    %67 = arith.addf %65, %66 : vector<1x128xf32>
    %68 = math.rsqrt %67 : vector<1x128xf32>
    %69 = arith.mulf %7, %68 : vector<1x128xf32>
    %70 = arith.mulf %56, %69 : vector<1x128xf32>
    %71 = arith.subf %8, %70 : vector<1x128xf32>
    %72 = vector.broadcast %69 : vector<1x128xf32> to vector<12x128xf32>
    %73 = arith.mulf %52, %72 : vector<12x128xf32>
    %74 = vector.broadcast %71 : vector<1x128xf32> to vector<12x128xf32>
    %75 = arith.addf %73, %74 : vector<12x128xf32>
    %76 = arith.truncf %75 : vector<12x128xf32> to vector<12x128xbf16>
    %cst_27 = arith.constant dense<0.000000e+00> : vector<12x128xf32>
    %77 = tpu.matmul %76, %13, %cst_27 {dimension_numbers = #tpu.dot_dimension_numbers<[1], [0], [0], [1], [0, 0, 1, 1], [], []>} : vector<12x128xbf16>, vector<128x128xbf16>, vector<12x128xf32> -> vector<12x128xf32>
    %78 = arith.truncf %77 : vector<12x128xf32> to vector<12x128xbf16>
    %cst_28 = arith.constant dense<0.000000e+00> : vector<12x128xf32>
    %79 = tpu.matmul %0, %78, %cst_28 {dimension_numbers = #tpu.dot_dimension_numbers<[1], [0], [0], [1], [0, 0, 1, 1], [], []>} : vector<12x12xbf16>, vector<12x128xbf16>, vector<12x128xf32> -> vector<12x128xf32>
    %80 = vector.broadcast %9 : vector<1x128xf32> to vector<12x128xf32>
    %81 = arith.addf %79, %80 : vector<12x128xf32>
    %cst_29 = arith.constant 0.000000e+00 : f32
    %82 = vector.broadcast %cst_29 : f32 to vector<12x128xf32>
    %83 = arith.maximumf %81, %82 : vector<12x128xf32>
    %84 = arith.truncf %83 : vector<12x128xf32> to vector<12x128xbf16>
    %85 = tpu.concatenate %45, %76, %84 in 1 : vector<12x128xbf16>, vector<12x128xbf16>, vector<12x128xbf16> -> vector<12x384xbf16>
    %cst_30 = arith.constant dense<0.000000e+00> : vector<12x128xf32>
    %86 = tpu.matmul %85, %14, %cst_30 {dimension_numbers = #tpu.dot_dimension_numbers<[1], [0], [0], [1], [0, 0, 1, 1], [], []>} : vector<12x384xbf16>, vector<384x128xbf16>, vector<12x128xf32> -> vector<12x128xf32>
    %87 = vector.broadcast %10 : vector<1x128xf32> to vector<12x128xf32>
    %88 = arith.addf %86, %87 : vector<12x128xf32>
    %c0_31 = arith.constant 0 : index
    %c0_32 = arith.constant 0 : index
    %89 = vector.load %arg4[%c0_31, %c0_32] : memref<12x128xf32, #tpu.memory_space<vmem>>, vector<12x128xf32>
    tpu.vector_store %arg4[%c0_31, %c0_32], %88 {strides = array<i32>} : memref<12x128xf32, #tpu.memory_space<vmem>>, vector<12x128xf32>,
    return
  }
}

</mosaic_0001>

<llo_original>
// kernel: tpu_custom_call.1
$region0: #{tpu_custom_call.1}
  #allocation0 [shape = 'u32[]', space=smem, size = 0x4, offset = 0x4, fixed_abs, tag = 'smem constant byte address 0x4 - core index']
  #allocation1 [shape = 'u32[144,128]{1,0:T(1,128)}', space=vmem, size = 0x12000, scoped, tag = 'internal scratch']
  %s0 = inlined_call_operand.hbm [shape: bf16[12,12], index: 0, kind: input, shape index: {}]
  %s1 = inlined_call_operand.hbm [shape: bf16[12,16], index: 1, kind: input, shape index: {}]
  %s2 = inlined_call_operand.hbm [shape: bf16[656,128], index: 2, kind: input, shape index: {}]
  %s3 = inlined_call_operand.vmem [shape: f32[8,128], index: 3, kind: input, shape index: {}]
  %s4 = inlined_call_operand.hbm [shape: f32[12,128], index: 4, kind: output, shape index: {}]
  %s5 = sld [smem:[#allocation0]]
  $region38: #{tpu_custom_call.1} parent=0
    _
  %s7 = ssub.s32 1, %s5
  %s8 = scalar_select 0, %s7, %s5
  $region1: #{tpu_custom_call.1} parent=0
    #allocation2 [shape = 'u8[4096]{0}', space=vmem, size = 0x1000, scoped, tag = 'input window, operand 0, single buffered']
    #allocation3 [shape = 's32[1]{0}', space=sflag, size = 0x4, scoped, tag = 'scoped memory for tpu_custom_call.1']
    #allocation4 [shape = 's32[1]{0}', space=sflag, size = 0x4, scoped, tag = 'scoped memory for tpu_custom_call.1']
    #allocation5 [shape = 'u8[4096]{0}', space=vmem, size = 0x1000, scoped, tag = 'input window, operand 1, single buffered']
    #allocation6 [shape = 's32[1]{0}', space=sflag, size = 0x4, scoped, tag = 'scoped memory for tpu_custom_call.1']
    #allocation7 [shape = 'u8[167936]{0}', space=vmem, size = 0x29000, scoped, tag = 'input window, operand 2, single buffered']
    #allocation8 [shape = 'u8[8192]{0}', space=vmem, size = 0x2000, scoped, tag = 'output window, operand 0, single buffered']
    %9 = vsyncpa [#allocation3], 0
    %10 = vsyncpa [#allocation6], 0
    %11 = vsyncpa [#allocation4], 0
    // Predicated region
    $region2: #{tpu_custom_call.1} parent=1 // pred_check
      _
    $region3: #{tpu_custom_call.1} parent=1 // pred_check_branch
      %13 = sbr.rel (0) target = $region5
    $region4: #{tpu_custom_call.1} parent=1 // pred_region
      %s15 = ssub.s32 128, 128
      %16 = vsyncadd [#allocation3], %s15
      %s17 = sshll.u32 [#allocation2], 4
      %s18 = int_to_ptr.vmem [resolvable:$true] %s17
      %23 = dma.hbm_to_vmem [thread:$0]  %s0, 128, %s18, [#allocation3], 64, 64, 4
    $region5: #{tpu_custom_call.1} parent=1 // pred_fallthru
      _
    // Predicated region
    $region6: #{tpu_custom_call.1} parent=1 // pred_check
      _
    $region7: #{tpu_custom_call.1} parent=1 // pred_check_branch
      %25 = sbr.rel (0) target = $region9
    $region8: #{tpu_custom_call.1} parent=1 // pred_region
      %s27 = ssub.s32 128, 128
      %28 = vsyncadd [#allocation6], %s27
      %s29 = sshll.u32 [#allocation5], 4
      %s30 = int_to_ptr.vmem [resolvable:$true] %s29
      %35 = dma.hbm_to_vmem [thread:$0]  %s1, 128, %s30, [#allocation6], 64, 64, 4
    $region9: #{tpu_custom_call.1} parent=1 // pred_fallthru
      _
    // Predicated region
    $region10: #{tpu_custom_call.1} parent=1 // pred_check
      _
    $region11: #{tpu_custom_call.1} parent=1 // pred_check_branch
      %37 = sbr.rel (0) target = $region13
    $region12: #{tpu_custom_call.1} parent=1 // pred_region
      %s39 = ssub.s32 5248, 5248
      %40 = vsyncadd [#allocation6], %s39
      %s41 = sshll.u32 [#allocation7], 4
      %s42 = int_to_ptr.vmem [resolvable:$true] %s41
      %47 = dma.hbm_to_vmem [thread:$0]  %s2, 5248, %s42, [#allocation6], 64, 64, 4
    $region13: #{tpu_custom_call.1} parent=1 // pred_fallthru
      _
    // Predicated region
    $region14: #{tpu_custom_call.1} parent=1 // pred_check
      _
    $region15: #{tpu_custom_call.1} parent=1 // pred_check_branch
      %49 = sbr.rel (0) target = $region17
    $region16: #{tpu_custom_call.1} parent=1 // pred_region
      _
    $region17: #{tpu_custom_call.1} parent=1 // pred_fallthru
      _
    // Predicated region
    $region18: #{tpu_custom_call.1} parent=1 // pred_check
      _
    $region19: #{tpu_custom_call.1} parent=1 // pred_check_branch
      %51 = sbr.rel (0) target = $region21
    $region20: #{tpu_custom_call.1} parent=1 // pred_region
      %52 = dma.done [#allocation3], 128
    $region21: #{tpu_custom_call.1} parent=1 // pred_fallthru
      _
    // Predicated region
    $region22: #{tpu_custom_call.1} parent=1 // pred_check
      _
    $region23: #{tpu_custom_call.1} parent=1 // pred_check_branch
      %54 = sbr.rel (0) target = $region25
    $region24: #{tpu_custom_call.1} parent=1 // pred_region
      %55 = dma.done [#allocation6], 128
    $region25: #{tpu_custom_call.1} parent=1 // pred_fallthru
      _
    // Predicated region
    $region26: #{tpu_custom_call.1} parent=1 // pred_check
      _
    $region27: #{tpu_custom_call.1} parent=1 // pred_check_branch
      %57 = sbr.rel (0) target = $region29
    $region28: #{tpu_custom_call.1} parent=1 // pred_region
      %58 = dma.done [#allocation6], 5248
    $region29: #{tpu_custom_call.1} parent=1 // pred_fallthru
      _
    %v60 = vld [vmem:[#allocation2] sm:$0xf]
    %v61 = vld [vmem:[#allocation2 + $0x4] sm:$0x3]
    %v62 = vld [vmem:[#allocation5] sm:$0xf]
    %v63 = vld [vmem:[#allocation5 + $0x4] sm:$0x3]
    %v64 = vld [vmem:[%s3] sm:$0xff]
    %v65 = vld [vmem:[#allocation7] sm:$0xf]
    %v66 = vld [vmem:[#allocation7 + $0x4] sm:$0xf]
    %v67 = vld [vmem:[#allocation7 + $0x8] sm:$0xf]
    %v68 = vld [vmem:[#allocation7 + $0xc] sm:$0xf]
    %v69 = vld [vmem:[#allocation7 + $0x10] sm:$0xf]
    %v70 = vld [vmem:[#allocation7 + $0x14] sm:$0xf]
    %v71 = vld [vmem:[#allocation7 + $0x18] sm:$0xf]
    %v72 = vld [vmem:[#allocation7 + $0x1c] sm:$0xf]
    %v73 = vld [vmem:[#allocation7 + $0x20] sm:$0xf]
    %v74 = vld [vmem:[#allocation7 + $0x24] sm:$0xf]
    %v75 = vld [vmem:[#allocation7 + $0x28] sm:$0xf]
    %v76 = vld [vmem:[#allocation7 + $0x2c] sm:$0xf]
    %v77 = vld [vmem:[#allocation7 + $0x30] sm:$0xf]
    %v78 = vld [vmem:[#allocation7 + $0x34] sm:$0xf]
    %v79 = vld [vmem:[#allocation7 + $0x38] sm:$0xf]
    %v80 = vld [vmem:[#allocation7 + $0x3c] sm:$0xf]
    %v81 = vld [vmem:[#allocation7 + $0x40] sm:$0xf]
    %v82 = vld [vmem:[#allocation7 + $0x44] sm:$0xf]
    %v83 = vld [vmem:[#allocation7 + $0x48] sm:$0xf]
    %v84 = vld [vmem:[#allocation7 + $0x4c] sm:$0xf]
    %v85 = vld [vmem:[#allocation7 + $0x50] sm:$0xf]
    %v86 = vld [vmem:[#allocation7 + $0x54] sm:$0xf]
    %v87 = vld [vmem:[#allocation7 + $0x58] sm:$0xf]
    %v88 = vld [vmem:[#allocation7 + $0x5c] sm:$0xf]
    %v89 = vld [vmem:[#allocation7 + $0x60] sm:$0xf]
    %v90 = vld [vmem:[#allocation7 + $0x64] sm:$0xf]
    %v91 = vld [vmem:[#allocation7 + $0x68] sm:$0xf]
    %v92 = vld [vmem:[#allocation7 + $0x6c] sm:$0xf]
    %v93 = vld [vmem:[#allocation7 + $0x70] sm:$0xf]
    %v94 = vld [vmem:[#allocation7 + $0x74] sm:$0xf]
    %v95 = vld [vmem:[#allocation7 + $0x78] sm:$0xf]
    %v96 = vld [vmem:[#allocation7 + $0x7c] sm:$0xf]
    %v97 = vld [vmem:[#allocation7 + $0x80] sm:$0xf]
    %v98 = vld [vmem:[#allocation7 + $0x84] sm:$0xf]
    %v99 = vld [vmem:[#allocation7 + $0x88] sm:$0xf]
    %v100 = vld [vmem:[#allocation7 + $0x8c] sm:$0xf]
    %v101 = vld [vmem:[#allocation7 + $0x90] sm:$0xf]
    %v102 = vld [vmem:[#allocation7 + $0x94] sm:$0xf]
    %v103 = vld [vmem:[#allocation7 + $0x98] sm:$0xf]
    %v104 = vld [vmem:[#allocation7 + $0x9c] sm:$0xf]
    %v105 = vld [vmem:[#allocation7 + $0xa0] sm:$0xf]
    %v106 = vld [vmem:[#allocation7 + $0xa4] sm:$0xf]
    %v107 = vld [vmem:[#allocation7 + $0xa8] sm:$0xf]
    %v108 = vld [vmem:[#allocation7 + $0xac] sm:$0xf]
    %v109 = vld [vmem:[#allocation7 + $0xb0] sm:$0xf]
    %v110 = vld [vmem:[#allocation7 + $0xb4] sm:$0xf]
    %v111 = vld [vmem:[#allocation7 + $0xb8] sm:$0xf]
    %v112 = vld [vmem:[#allocation7 + $0xbc] sm:$0xf]
    %v113 = vld [vmem:[#allocation7 + $0xc0] sm:$0xf]
    %v114 = vld [vmem:[#allocation7 + $0xc4] sm:$0xf]
    %v115 = vld [vmem:[#allocation7 + $0xc8] sm:$0xf]
    %v116 = vld [vmem:[#allocation7 + $0xcc] sm:$0xf]
    %v117 = vld [vmem:[#allocation7 + $0xd0] sm:$0xf]
    %v118 = vld [vmem:[#allocation7 + $0xd4] sm:$0xf]
    %v119 = vld [vmem:[#allocation7 + $0xd8] sm:$0xf]
    %v120 = vld [vmem:[#allocation7 + $0xdc] sm:$0xf]
    %v121 = vld [vmem:[#allocation7 + $0xe0] sm:$0xf]
    %v122 = vld [vmem:[#allocation7 + $0xe4] sm:$0xf]
    %v123 = vld [vmem:[#allocation7 + $0xe8] sm:$0xf]
    %v124 = vld [vmem:[#allocation7 + $0xec] sm:$0xf]
    %v125 = vld [vmem:[#allocation7 + $0xf0] sm:$0xf]
    %v126 = vld [vmem:[#allocation7 + $0xf4] sm:$0xf]
    %v127 = vld [vmem:[#allocation7 + $0xf8] sm:$0xf]
    %v128 = vld [vmem:[#allocation7 + $0xfc] sm:$0xf]
    %v129 = vld [vmem:[#allocation7 + $0x100] sm:$0xf]
    %v130 = vld [vmem:[#allocation7 + $0x104] sm:$0xf]
    %v131 = vld [vmem:[#allocation7 + $0x108] sm:$0xf]
    %v132 = vld [vmem:[#allocation7 + $0x10c] sm:$0xf]
    %v133 = vld [vmem:[#allocation7 + $0x110] sm:$0xf]
    %v134 = vld [vmem:[#allocation7 + $0x114] sm:$0xf]
    %v135 = vld [vmem:[#allocation7 + $0x118] sm:$0xf]
    %v136 = vld [vmem:[#allocation7 + $0x11c] sm:$0xf]
    %v137 = vld [vmem:[#allocation7 + $0x120] sm:$0xf]
    %v138 = vld [vmem:[#allocation7 + $0x124] sm:$0xf]
    %v139 = vld [vmem:[#allocation7 + $0x128] sm:$0xf]
    %v140 = vld [vmem:[#allocation7 + $0x12c] sm:$0xf]
    %v141 = vld [vmem:[#allocation7 + $0x130] sm:$0xf]
    %v142 = vld [vmem:[#allocation7 + $0x134] sm:$0xf]
    %v143 = vld [vmem:[#allocation7 + $0x138] sm:$0xf]
    %v144 = vld [vmem:[#allocation7 + $0x13c] sm:$0xf]
    %v145 = vld [vmem:[#allocation7 + $0x140] sm:$0xf]
    %v146 = vld [vmem:[#allocation7 + $0x144] sm:$0xf]
    %v149 = vunpack.c.l.b16 %v62
    %v150 = vunpack.c.l.b16 %v63
    %v151 = vpack.c.b16 %v150, %v149
    %v154 = vunpack.c.l.b16 %v65
    %v155 = vunpack.c.l.b16 %v66
    %v156 = vpack.c.b16 %v155, %v154
    %vm158 = vcmask 130048
    %v160 = vsel %vm158, %v151, 0
    %162 = vmatprep.subr.bf16.mxu0 0
    %163 = vmatpush1.bf16.msra.mxu0 %v156
    %164 = vmatprep.subr.bf16.mxu0 0
    %165 = vmatpush1.bf16.msra.mxu0 0
    %166 = vmatprep.subr.bf16.mxu0 0
    %167 = vmatpush1.bf16.msra.mxu0 0
    %168 = vmatprep.subr.bf16.mxu0 0
    %169 = vmatpush1.bf16.msra.mxu0 0
    %170 = vmatprep.subr.bf16.mxu0 0
    %171 = vmatpush1.bf16.msra.mxu0 0
    %172 = vmatprep.subr.bf16.mxu0 0
    %173 = vmatpush1.bf16.msra.mxu0 0
    %174 = vmatprep.subr.bf16.mxu0 0
    %175 = vmatpush1.bf16.msra.mxu0 0
    %176 = vmatprep.subr.bf16.mxu0 0
    %177 = vmatpush1.bf16.msra.mxu0 0
    %178 = vmatprep.subr.bf16.mxu0 0
    %179 = vmatpush1.bf16.msra.mxu0 0
    %180 = vmatprep.subr.bf16.mxu0 0
    %181 = vmatpush1.bf16.msra.mxu0 0
    %182 = vmatprep.subr.bf16.mxu0 0
    %183 = vmatpush1.bf16.msra.mxu0 0
    %184 = vmatprep.subr.bf16.mxu0 0
    %185 = vmatpush1.bf16.msra.mxu0 0
    %186 = vmatprep.subr.bf16.mxu0 0
    %187 = vmatpush1.bf16.msra.mxu0 0
    %188 = vmatprep.subr.bf16.mxu0 0
    %189 = vmatpush1.bf16.msra.mxu0 0
    %190 = vmatprep.subr.bf16.mxu0 0
    %191 = vmatpush1.bf16.msra.mxu0 0
    %192 = vmatprep.subr.bf16.mxu0 0
    %193 = vmatpush1.bf16.msra.mxu0 0
    %194 = vmatprep.mubr.bf16.mxu0 0
    %195 = vmatmul.mubr.bf16.gmra.mrb[0].mxu0 %v160
    %v196 = vpop.f32.mrb[0].mxu0
    %v197 = vadd.f32 0.0, %v196
    %v198 = vpop.f32.mrb[0].mxu0
    %v199 = vpop.f32.mrb[0].mxu0
    %v200 = vadd.f32 0.0, %v199
    %v201 = vpop.f32.mrb[0].mxu0
    %202 = vdwg.mxu0
    %v203 = vpack.c.bf16 %v200, %v197
    %v204 = vlaneseq
    %v205 = vshrl.u32 %v204, 7
    %v206 = vsub.s32 0, %v205
    %v207 = vrot.slane %v64, %v206
    %v210 = vunpack.c.l.b16 %v60
    %v211 = vunpack.c.l.b16 %v61
    %v212 = vpack.c.b16 %v211, %v210
    %vm213 = vcmask 97280
    %v215 = vsel %vm213, %v212, 0
    %vm217 = vcmask 1045504
    %v219 = vsel %vm217, %v203, 0
    %221 = vmatprep.subr.bf16.mxu0 0
    %222 = vmatpush1.bf16.msra.mxu0 %v219
    %223 = vmatprep.subr.bf16.mxu0 0
    %224 = vmatpush1.bf16.msra.mxu0 0
    %225 = vmatprep.subr.bf16.mxu0 0
    %226 = vmatpush1.bf16.msra.mxu0 0
    %227 = vmatprep.subr.bf16.mxu0 0
    %228 = vmatpush1.bf16.msra.mxu0 0
    %229 = vmatprep.subr.bf16.mxu0 0
    %230 = vmatpush1.bf16.msra.mxu0 0
    %231 = vmatprep.subr.bf16.mxu0 0
    %232 = vmatpush1.bf16.msra.mxu0 0
    %233 = vmatprep.subr.bf16.mxu0 0
    %234 = vmatpush1.bf16.msra.mxu0 0
    %235 = vmatprep.subr.bf16.mxu0 0
    %236 = vmatpush1.bf16.msra.mxu0 0
    %237 = vmatprep.subr.bf16.mxu0 0
    %238 = vmatpush1.bf16.msra.mxu0 0
    %239 = vmatprep.subr.bf16.mxu0 0
    %240 = vmatpush1.bf16.msra.mxu0 0
    %241 = vmatprep.subr.bf16.mxu0 0
    %242 = vmatpush1.bf16.msra.mxu0 0
    %243 = vmatprep.subr.bf16.mxu0 0
    %244 = vmatpush1.bf16.msra.mxu0 0
    %245 = vmatprep.subr.bf16.mxu0 0
    %246 = vmatpush1.bf16.msra.mxu0 0
    %247 = vmatprep.subr.bf16.mxu0 0
    %248 = vmatpush1.bf16.msra.mxu0 0
    %249 = vmatprep.subr.bf16.mxu0 0
    %250 = vmatpush1.bf16.msra.mxu0 0
    %251 = vmatprep.subr.bf16.mxu0 0
    %252 = vmatpush1.bf16.msra.mxu0 0
    %253 = vmatprep.mubr.bf16.mxu0 0
    %254 = vmatmul.mubr.bf16.gmra.mrb[0].mxu0 %v215
    %v255 = vpop.f32.mrb[0].mxu0
    %v256 = vadd.f32 %v207, %v255
    %v257 = vpop.f32.mrb[0].mxu0
    %v258 = vpop.f32.mrb[0].mxu0
    %v259 = vadd.f32 %v207, %v258
    %v260 = vpop.f32.mrb[0].mxu0
    %261 = vdwg.mxu0
    %v262 = vmax.f32 %v256, 0.0
    %v263 = vmax.f32 %v259, 0.0
    %vm264 = vcmask 1043456
    %v265 = vsel %vm264, %v263, 0.0
    %v266 = vadd.f32 %v262, %v265
    %v267 = vrot.slane %v266, 4
    %v268 = vadd.f32 %v266, %v267
    %v269 = vrot.slane %v268, 2
    %v270 = vadd.f32 %v268, %v269
    %v271 = vrot.slane %v270, 1
    %v272 = vadd.f32 %v270, %v271
    %v273 = vrcp.pop 12.0
    %v274 = vmul.f32 %v272, %v273
    %v275 = vmul.f32 %v262, %v262
    %v276 = vmul.f32 %v263, %v263
    %v277 = vsel %vm264, %v276, 0.0
    %v278 = vadd.f32 %v275, %v277
    %v279 = vrot.slane %v278, 4
    %v280 = vadd.f32 %v278, %v279
    %v281 = vrot.slane %v280, 2
    %v282 = vadd.f32 %v280, %v281
    %v283 = vrot.slane %v282, 1
    %v284 = vadd.f32 %v282, %v283
    %v285 = vmul.f32 %v284, %v273
    %v286 = vmul.f32 %v274, %v274
    %v287 = vsub.f32 %v285, %v286
    %v288 = vmax.f32 %v287, 0.0
    %v289 = vadd.f32 %v288, 1e-05
    %v290 = vrsqrt.pop %v289
    %v291 = vmul.f32 %v64, %v290
    %v292 = vmul.f32 %v274, %v291
    %v294 = vrot.slane %v292, 7
    %v296 = vsub.f32 %v64, %v294
    %v297 = vlaneseq
    %v298 = vshrl.u32 %v297, 7
    %v299 = vsub.s32 1, %v298
    %v300 = vrot.slane %v291, %v299
    %v301 = vmul.f32 %v262, %v300
    %v302 = vmul.f32 %v263, %v300
    %v303 = vlaneseq
    %v304 = vshrl.u32 %v303, 7
    %v305 = vsub.s32 2, %v304
    %v306 = vrot.slane %v296, %v305
    %v307 = vadd.f32 %v301, %v306
    %v308 = vadd.f32 %v302, %v306
    %v309 = vpack.c.bf16 %v308, %v307
    %v326 = vunpack.c.l.b16 %v67
    %v327 = vunpack.c.l.b16 %v68
    %v328 = vunpack.c.l.b16 %v69
    %v329 = vunpack.c.l.b16 %v70
    %v330 = vunpack.c.l.b16 %v71
    %v331 = vunpack.c.l.b16 %v72
    %v332 = vunpack.c.l.b16 %v73
    %v333 = vunpack.c.l.b16 %v74
    %v334 = vunpack.c.l.b16 %v75
    %v335 = vunpack.c.l.b16 %v76
    %v336 = vunpack.c.l.b16 %v77
    %v337 = vunpack.c.l.b16 %v78
    %v338 = vunpack.c.l.b16 %v79
    %v339 = vunpack.c.l.b16 %v80
    %v340 = vunpack.c.l.b16 %v81
    %v341 = vunpack.c.l.b16 %v82
    %v342 = vpack.c.b16 %v327, %v326
    %v343 = vpack.c.b16 %v329, %v328
    %v344 = vpack.c.b16 %v331, %v330
    %v345 = vpack.c.b16 %v333, %v332
    %v346 = vpack.c.b16 %v335, %v334
    %v347 = vpack.c.b16 %v337, %v336
    %v348 = vpack.c.b16 %v339, %v338
    %v349 = vpack.c.b16 %v341, %v340
    %358 = vmatprep.subr.bf16.mxu0 0
    %359 = vmatpush1.bf16.msra.mxu0 %v342
    %360 = vmatprep.subr.bf16.mxu0 0
    %361 = vmatpush1.bf16.msra.mxu0 %v343
    %362 = vmatprep.subr.bf16.mxu0 0
    %363 = vmatpush1.bf16.msra.mxu0 %v344
    %364 = vmatprep.subr.bf16.mxu0 0
    %365 = vmatpush1.bf16.msra.mxu0 %v345
    %366 = vmatprep.subr.bf16.mxu0 0
    %367 = vmatpush1.bf16.msra.mxu0 %v346
    %368 = vmatprep.subr.bf16.mxu0 0
    %369 = vmatpush1.bf16.msra.mxu0 %v347
    %370 = vmatprep.subr.bf16.mxu0 0
    %371 = vmatpush1.bf16.msra.mxu0 %v348
    %372 = vmatprep.subr.bf16.mxu0 0
    %373 = vmatpush1.bf16.msra.mxu0 %v349
    %374 = vmatprep.subr.bf16.mxu0 0
    %375 = vmatpush1.bf16.msra.mxu0 0
    %376 = vmatprep.subr.bf16.mxu0 0
    %377 = vmatpush1.bf16.msra.mxu0 0
    %378 = vmatprep.subr.bf16.mxu0 0
    %379 = vmatpush1.bf16.msra.mxu0 0
    %380 = vmatprep.subr.bf16.mxu0 0
    %381 = vmatpush1.bf16.msra.mxu0 0
    %382 = vmatprep.subr.bf16.mxu0 0
    %383 = vmatpush1.bf16.msra.mxu0 0
    %384 = vmatprep.subr.bf16.mxu0 0
    %385 = vmatpush1.bf16.msra.mxu0 0
    %386 = vmatprep.subr.bf16.mxu0 0
    %387 = vmatpush1.bf16.msra.mxu0 0
    %388 = vmatprep.subr.bf16.mxu0 0
    %389 = vmatpush1.bf16.msra.mxu0 0
    %390 = vmatprep.mubr.bf16.mxu0 0
    %391 = vmatmul.mubr.bf16.gmra.mrb[0].mxu0 %v309
    %v392 = vpop.f32.mrb[0].mxu0
    %v393 = vadd.f32 0.0, %v392
    %v394 = vpop.f32.mrb[0].mxu0
    %v395 = vpop.f32.mrb[0].mxu0
    %v396 = vadd.f32 0.0, %v395
    %v397 = vpop.f32.mrb[0].mxu0
    %398 = vdwg.mxu0
    %v399 = vpack.c.bf16 %v396, %v393
    %v400 = vlaneseq
    %v401 = vshrl.u32 %v400, 7
    %v402 = vsub.s32 3, %v401
    %v403 = vrot.slane %v64, %v402
    %v405 = vsel %vm217, %v399, 0
    %407 = vmatprep.subr.bf16.mxu0 0
    %408 = vmatpush1.bf16.msra.mxu0 %v405
    %409 = vmatprep.subr.bf16.mxu0 0
    %410 = vmatpush1.bf16.msra.mxu0 0
    %411 = vmatprep.subr.bf16.mxu0 0
    %412 = vmatpush1.bf16.msra.mxu0 0
    %413 = vmatprep.subr.bf16.mxu0 0
    %414 = vmatpush1.bf16.msra.mxu0 0
    %415 = vmatprep.subr.bf16.mxu0 0
    %416 = vmatpush1.bf16.msra.mxu0 0
    %417 = vmatprep.subr.bf16.mxu0 0
    %418 = vmatpush1.bf16.msra.mxu0 0
    %419 = vmatprep.subr.bf16.mxu0 0
    %420 = vmatpush1.bf16.msra.mxu0 0
    %421 = vmatprep.subr.bf16.mxu0 0
    %422 = vmatpush1.bf16.msra.mxu0 0
    %423 = vmatprep.subr.bf16.mxu0 0
    %424 = vmatpush1.bf16.msra.mxu0 0
    %425 = vmatprep.subr.bf16.mxu0 0
    %426 = vmatpush1.bf16.msra.mxu0 0
    %427 = vmatprep.subr.bf16.mxu0 0
    %428 = vmatpush1.bf16.msra.mxu0 0
    %429 = vmatprep.subr.bf16.mxu0 0
    %430 = vmatpush1.bf16.msra.mxu0 0
    %431 = vmatprep.subr.bf16.mxu0 0
    %432 = vmatpush1.bf16.msra.mxu0 0
    %433 = vmatprep.subr.bf16.mxu0 0
    %434 = vmatpush1.bf16.msra.mxu0 0
    %435 = vmatprep.subr.bf16.mxu0 0
    %436 = vmatpush1.bf16.msra.mxu0 0
    %437 = vmatprep.subr.bf16.mxu0 0
    %438 = vmatpush1.bf16.msra.mxu0 0
    %439 = vmatprep.mubr.bf16.mxu0 0
    %440 = vmatmul.mubr.bf16.gmra.mrb[0].mxu0 %v215
    %v441 = vpop.f32.mrb[0].mxu0
    %v442 = vadd.f32 %v403, %v441
    %v443 = vpop.f32.mrb[0].mxu0
    %v444 = vpop.f32.mrb[0].mxu0
    %v445 = vadd.f32 %v403, %v444
    %v446 = vpop.f32.mrb[0].mxu0
    %447 = vdwg.mxu0
    %v448 = vmax.f32 %v442, 0.0
    %v449 = vmax.f32 %v445, 0.0
    %v450 = vsel %vm264, %v449, 0.0
    %v451 = vadd.f32 %v448, %v450
    %v452 = vrot.slane %v451, 4
    %v453 = vadd.f32 %v451, %v452
    %v454 = vrot.slane %v453, 2
    %v455 = vadd.f32 %v453, %v454
    %v456 = vrot.slane %v455, 1
    %v457 = vadd.f32 %v455, %v456
    %v458 = vmul.f32 %v457, %v273
    %v459 = vmul.f32 %v448, %v448
    %v460 = vmul.f32 %v449, %v449
    %v461 = vsel %vm264, %v460, 0.0
    %v462 = vadd.f32 %v459, %v461
    %v463 = vrot.slane %v462, 4
    %v464 = vadd.f32 %v462, %v463
    %v465 = vrot.slane %v464, 2
    %v466 = vadd.f32 %v464, %v465
    %v467 = vrot.slane %v466, 1
    %v468 = vadd.f32 %v466, %v467
    %v469 = vmul.f32 %v468, %v273
    %v470 = vmul.f32 %v458, %v458
    %v471 = vsub.f32 %v469, %v470
    %v472 = vmax.f32 %v471, 0.0
    %v473 = vadd.f32 %v472, 1e-05
    %v474 = vrsqrt.pop %v473
    %v475 = vmul.f32 %v64, %v474
    %v476 = vmul.f32 %v458, %v475
    %v478 = vrot.slane %v476, 7
    %v480 = vsub.f32 %v64, %v478
    %v481 = vlaneseq
    %v482 = vshrl.u32 %v481, 7
    %v483 = vsub.s32 4, %v482
    %v484 = vrot.slane %v475, %v483
    %v485 = vmul.f32 %v448, %v484
    %v486 = vmul.f32 %v449, %v484
    %v487 = vlaneseq
    %v488 = vshrl.u32 %v487, 7
    %v489 = vsub.s32 5, %v488
    %v490 = vrot.slane %v480, %v489
    %v491 = vadd.f32 %v485, %v490
    %v492 = vadd.f32 %v486, %v490
    %v493 = vpack.c.bf16 %v492, %v491
    %v510 = vunpack.c.l.b16 %v83
    %v511 = vunpack.c.l.b16 %v84
    %v512 = vunpack.c.l.b16 %v85
    %v513 = vunpack.c.l.b16 %v86
    %v514 = vunpack.c.l.b16 %v87
    %v515 = vunpack.c.l.b16 %v88
    %v516 = vunpack.c.l.b16 %v89
    %v517 = vunpack.c.l.b16 %v90
    %v518 = vunpack.c.l.b16 %v91
    %v519 = vunpack.c.l.b16 %v92
    %v520 = vunpack.c.l.b16 %v93
    %v521 = vunpack.c.l.b16 %v94
    %v522 = vunpack.c.l.b16 %v95
    %v523 = vunpack.c.l.b16 %v96
    %v524 = vunpack.c.l.b16 %v97
    %v525 = vunpack.c.l.b16 %v98
    %v526 = vpack.c.b16 %v511, %v510
    %v527 = vpack.c.b16 %v513, %v512
    %v528 = vpack.c.b16 %v515, %v514
    %v529 = vpack.c.b16 %v517, %v516
    %v530 = vpack.c.b16 %v519, %v518
    %v531 = vpack.c.b16 %v521, %v520
    %v532 = vpack.c.b16 %v523, %v522
    %v533 = vpack.c.b16 %v525, %v524
    %542 = vmatprep.subr.bf16.mxu0 0
    %543 = vmatpush1.bf16.msra.mxu0 %v526
    %544 = vmatprep.subr.bf16.mxu0 0
    %545 = vmatpush1.bf16.msra.mxu0 %v527
    %546 = vmatprep.subr.bf16.mxu0 0
    %547 = vmatpush1.bf16.msra.mxu0 %v528
    %548 = vmatprep.subr.bf16.mxu0 0
    %549 = vmatpush1.bf16.msra.mxu0 %v529
    %550 = vmatprep.subr.bf16.mxu0 0
    %551 = vmatpush1.bf16.msra.mxu0 %v530
    %552 = vmatprep.subr.bf16.mxu0 0
    %553 = vmatpush1.bf16.msra.mxu0 %v531
    %554 = vmatprep.subr.bf16.mxu0 0
    %555 = vmatpush1.bf16.msra.mxu0 %v532
    %556 = vmatprep.subr.bf16.mxu0 0
    %557 = vmatpush1.bf16.msra.mxu0 %v533
    %558 = vmatprep.subr.bf16.mxu0 0
    %559 = vmatpush1.bf16.msra.mxu0 0
    %560 = vmatprep.subr.bf16.mxu0 0
    %561 = vmatpush1.bf16.msra.mxu0 0
    %562 = vmatprep.subr.bf16.mxu0 0
    %563 = vmatpush1.bf16.msra.mxu0 0
    %564 = vmatprep.subr.bf16.mxu0 0
    %565 = vmatpush1.bf16.msra.mxu0 0
    %566 = vmatprep.subr.bf16.mxu0 0
    %567 = vmatpush1.bf16.msra.mxu0 0
    %568 = vmatprep.subr.bf16.mxu0 0
    %569 = vmatpush1.bf16.msra.mxu0 0
    %570 = vmatprep.subr.bf16.mxu0 0
    %571 = vmatpush1.bf16.msra.mxu0 0
    %572 = vmatprep.subr.bf16.mxu0 0
    %573 = vmatpush1.bf16.msra.mxu0 0
    %574 = vmatprep.mubr.bf16.mxu0 0
    %575 = vmatmul.mubr.bf16.gmra.mrb[0].mxu0 %v493
    %v576 = vpop.f32.mrb[0].mxu0
    %v577 = vadd.f32 0.0, %v576
    %v578 = vpop.f32.mrb[0].mxu0
    %v579 = vpop.f32.mrb[0].mxu0
    %v580 = vadd.f32 0.0, %v579
    %v581 = vpop.f32.mrb[0].mxu0
    %582 = vdwg.mxu0
    %v583 = vpack.c.bf16 %v580, %v577
    %v584 = vlaneseq
    %v585 = vshrl.u32 %v584, 7
    %v586 = vsub.s32 6, %v585
    %v587 = vrot.slane %v64, %v586
    %v589 = vsel %vm217, %v583, 0
    %591 = vmatprep.subr.bf16.mxu0 0
    %592 = vmatpush1.bf16.msra.mxu0 %v589
    %593 = vmatprep.subr.bf16.mxu0 0
    %594 = vmatpush1.bf16.msra.mxu0 0
    %595 = vmatprep.subr.bf16.mxu0 0
    %596 = vmatpush1.bf16.msra.mxu0 0
    %597 = vmatprep.subr.bf16.mxu0 0
    %598 = vmatpush1.bf16.msra.mxu0 0
    %599 = vmatprep.subr.bf16.mxu0 0
    %600 = vmatpush1.bf16.msra.mxu0 0
    %601 = vmatprep.subr.bf16.mxu0 0
    %602 = vmatpush1.bf16.msra.mxu0 0
    %603 = vmatprep.subr.bf16.mxu0 0
    %604 = vmatpush1.bf16.msra.mxu0 0
    %605 = vmatprep.subr.bf16.mxu0 0
    %606 = vmatpush1.bf16.msra.mxu0 0
    %607 = vmatprep.subr.bf16.mxu0 0
    %608 = vmatpush1.bf16.msra.mxu0 0
    %609 = vmatprep.subr.bf16.mxu0 0
    %610 = vmatpush1.bf16.msra.mxu0 0
    %611 = vmatprep.subr.bf16.mxu0 0
    %612 = vmatpush1.bf16.msra.mxu0 0
    %613 = vmatprep.subr.bf16.mxu0 0
    %614 = vmatpush1.bf16.msra.mxu0 0
    %615 = vmatprep.subr.bf16.mxu0 0
    %616 = vmatpush1.bf16.msra.mxu0 0
    %617 = vmatprep.subr.bf16.mxu0 0
    %618 = vmatpush1.bf16.msra.mxu0 0
    %619 = vmatprep.subr.bf16.mxu0 0
    %620 = vmatpush1.bf16.msra.mxu0 0
    %621 = vmatprep.subr.bf16.mxu0 0
    %622 = vmatpush1.bf16.msra.mxu0 0
    %623 = vmatprep.mubr.bf16.mxu0 0
    %624 = vmatmul.mubr.bf16.gmra.mrb[0].mxu0 %v215
    %v625 = vpop.f32.mrb[0].mxu0
    %v626 = vadd.f32 %v587, %v625
    %v627 = vpop.f32.mrb[0].mxu0
    %v628 = vpop.f32.mrb[0].mxu0
    %v629 = vadd.f32 %v587, %v628
    %v630 = vpop.f32.mrb[0].mxu0
    %631 = vdwg.mxu0
    %v632 = vmax.f32 %v626, 0.0
    %v633 = vmax.f32 %v629, 0.0
    %v634 = vpack.c.bf16 %v633, %v632
    %v635 = vlaneseq
    %v636 = vshrl.u32 %v635, 7
    %v637 = vsub.s32 7, %v636
    %v638 = vrot.slane %v64, %v637
    %v687 = vunpack.c.l.b16 %v99
    %v688 = vunpack.c.l.b16 %v100
    %v689 = vunpack.c.l.b16 %v101
    %v690 = vunpack.c.l.b16 %v102
    %v691 = vunpack.c.l.b16 %v103
    %v692 = vunpack.c.l.b16 %v104
    %v693 = vunpack.c.l.b16 %v105
    %v694 = vunpack.c.l.b16 %v106
    %v695 = vunpack.c.l.b16 %v107
    %v696 = vunpack.c.l.b16 %v108
    %v697 = vunpack.c.l.b16 %v109
    %v698 = vunpack.c.l.b16 %v110
    %v699 = vunpack.c.l.b16 %v111
    %v700 = vunpack.c.l.b16 %v112
    %v701 = vunpack.c.l.b16 %v113
    %v702 = vunpack.c.l.b16 %v114
    %v703 = vunpack.c.l.b16 %v115
    %v704 = vunpack.c.l.b16 %v116
    %v705 = vunpack.c.l.b16 %v117
    %v706 = vunpack.c.l.b16 %v118
    %v707 = vunpack.c.l.b16 %v119
    %v708 = vunpack.c.l.b16 %v120
    %v709 = vunpack.c.l.b16 %v121
    %v710 = vunpack.c.l.b16 %v122
    %v711 = vunpack.c.l.b16 %v123
    %v712 = vunpack.c.l.b16 %v124
    %v713 = vunpack.c.l.b16 %v125
    %v714 = vunpack.c.l.b16 %v126
    %v715 = vunpack.c.l.b16 %v127
    %v716 = vunpack.c.l.b16 %v128
    %v717 = vunpack.c.l.b16 %v129
    %v718 = vunpack.c.l.b16 %v130
    %v719 = vunpack.c.l.b16 %v131
    %v720 = vunpack.c.l.b16 %v132
    %v721 = vunpack.c.l.b16 %v133
    %v722 = vunpack.c.l.b16 %v134
    %v723 = vunpack.c.l.b16 %v135
    %v724 = vunpack.c.l.b16 %v136
    %v725 = vunpack.c.l.b16 %v137
    %v726 = vunpack.c.l.b16 %v138
    %v727 = vunpack.c.l.b16 %v139
    %v728 = vunpack.c.l.b16 %v140
    %v729 = vunpack.c.l.b16 %v141
    %v730 = vunpack.c.l.b16 %v142
    %v731 = vunpack.c.l.b16 %v143
    %v732 = vunpack.c.l.b16 %v144
    %v733 = vunpack.c.l.b16 %v145
    %v734 = vunpack.c.l.b16 %v146
    %v735 = vpack.c.b16 %v688, %v687
    %v736 = vpack.c.b16 %v690, %v689
    %v737 = vpack.c.b16 %v692, %v691
    %v738 = vpack.c.b16 %v694, %v693
    %v739 = vpack.c.b16 %v696, %v695
    %v740 = vpack.c.b16 %v698, %v697
    %v741 = vpack.c.b16 %v700, %v699
    %v742 = vpack.c.b16 %v702, %v701
    %v743 = vpack.c.b16 %v704, %v703
    %v744 = vpack.c.b16 %v706, %v705
    %v745 = vpack.c.b16 %v708, %v707
    %v746 = vpack.c.b16 %v710, %v709
    %v747 = vpack.c.b16 %v712, %v711
    %v748 = vpack.c.b16 %v714, %v713
    %v749 = vpack.c.b16 %v716, %v715
    %v750 = vpack.c.b16 %v718, %v717
    %v751 = vpack.c.b16 %v720, %v719
    %v752 = vpack.c.b16 %v722, %v721
    %v753 = vpack.c.b16 %v724, %v723
    %v754 = vpack.c.b16 %v726, %v725
    %v755 = vpack.c.b16 %v728, %v727
    %v756 = vpack.c.b16 %v730, %v729
    %v757 = vpack.c.b16 %v732, %v731
    %v758 = vpack.c.b16 %v734, %v733
    %783 = vmatprep.subr.bf16.mxu0 0
    %784 = vmatpush1.bf16.msra.mxu0 %v735
    %785 = vmatprep.subr.bf16.mxu0 0
    %786 = vmatpush1.bf16.msra.mxu0 %v736
    %787 = vmatprep.subr.bf16.mxu0 0
    %788 = vmatpush1.bf16.msra.mxu0 %v737
    %789 = vmatprep.subr.bf16.mxu0 0
    %790 = vmatpush1.bf16.msra.mxu0 %v738
    %791 = vmatprep.subr.bf16.mxu0 0
    %792 = vmatpush1.bf16.msra.mxu0 %v739
    %793 = vmatprep.subr.bf16.mxu0 0
    %794 = vmatpush1.bf16.msra.mxu0 %v740
    %795 = vmatprep.subr.bf16.mxu0 0
    %796 = vmatpush1.bf16.msra.mxu0 %v741
    %797 = vmatprep.subr.bf16.mxu0 0
    %798 = vmatpush1.bf16.msra.mxu0 %v742
    %799 = vmatprep.subr.bf16.mxu0 0
    %800 = vmatpush1.bf16.msra.mxu0 %v743
    %801 = vmatprep.subr.bf16.mxu0 0
    %802 = vmatpush1.bf16.msra.mxu0 %v744
    %803 = vmatprep.subr.bf16.mxu0 0
    %804 = vmatpush1.bf16.msra.mxu0 %v745
    %805 = vmatprep.subr.bf16.mxu0 0
    %806 = vmatpush1.bf16.msra.mxu0 %v746
    %807 = vmatprep.subr.bf16.mxu0 0
    %808 = vmatpush1.bf16.msra.mxu0 %v747
    %809 = vmatprep.subr.bf16.mxu0 0
    %810 = vmatpush1.bf16.msra.mxu0 %v748
    %811 = vmatprep.subr.bf16.mxu0 0
    %812 = vmatpush1.bf16.msra.mxu0 %v749
    %813 = vmatprep.subr.bf16.mxu0 0
    %814 = vmatpush1.bf16.msra.mxu0 %v750
    %815 = vmatprep.mubr.bf16.mxu0 %v493
    %816 = vmatmul.mubr.bf16.gmra.mrb[0].mxu0 %v309
    %v817 = vpop.f32.mrb[0].mxu0
    %v818 = vadd.f32 %v638, %v817
    %v819 = vpop.f32.mrb[0].mxu0
    %v820 = vpop.f32.mrb[0].mxu0
    %v821 = vadd.f32 %v638, %v820
    %v822 = vpop.f32.mrb[0].mxu0
    %823 = vdwg.mxu0
    %824 = vmatprep.subr.bf16.mxu0 0
    %825 = vmatpush1.bf16.msra.mxu0 %v751
    %826 = vmatprep.subr.bf16.mxu0 0
    %827 = vmatpush1.bf16.msra.mxu0 %v752
    %828 = vmatprep.subr.bf16.mxu0 0
    %829 = vmatpush1.bf16.msra.mxu0 %v753
    %830 = vmatprep.subr.bf16.mxu0 0
    %831 = vmatpush1.bf16.msra.mxu0 %v754
    %832 = vmatprep.subr.bf16.mxu0 0
    %833 = vmatpush1.bf16.msra.mxu0 %v755
    %834 = vmatprep.subr.bf16.mxu0 0
    %835 = vmatpush1.bf16.msra.mxu0 %v756
    %836 = vmatprep.subr.bf16.mxu0 0
    %837 = vmatpush1.bf16.msra.mxu0 %v757
    %838 = vmatprep.subr.bf16.mxu0 0
    %839 = vmatpush1.bf16.msra.mxu0 %v758
    %840 = vmatprep.subr.bf16.mxu0 0
    %841 = vmatpush1.bf16.msra.mxu0 0
    %842 = vmatprep.subr.bf16.mxu0 0
    %843 = vmatpush1.bf16.msra.mxu0 0
    %844 = vmatprep.subr.bf16.mxu0 0
    %845 = vmatpush1.bf16.msra.mxu0 0
    %846 = vmatprep.subr.bf16.mxu0 0
    %847 = vmatpush1.bf16.msra.mxu0 0
    %848 = vmatprep.subr.bf16.mxu0 0
    %849 = vmatpush1.bf16.msra.mxu0 0
    %850 = vmatprep.subr.bf16.mxu0 0
    %851 = vmatpush1.bf16.msra.mxu0 0
    %852 = vmatprep.subr.bf16.mxu0 0
    %853 = vmatpush1.bf16.msra.mxu0 0
    %854 = vmatprep.subr.bf16.mxu0 0
    %855 = vmatpush1.bf16.msra.mxu0 0
    %856 = vmatprep.mubr.bf16.mxu0 0
    %857 = vmatmul.mubr.bf16.gmra.mrb[0].mxu0 %v634
    %v858 = vpop.f32.mrb[0].mxu0
    %v859 = vadd.f32 %v818, %v858
    %v860 = vpop.f32.mrb[0].mxu0
    %v861 = vpop.f32.mrb[0].mxu0
    %v862 = vadd.f32 %v821, %v861
    %v863 = vpop.f32.mrb[0].mxu0
    %864 = vdwg.mxu0
    %865 = vst [vmem:[#allocation8] sm:$0xff] %v859
    %866 = vst [vmem:[#allocation8 + $0x8] sm:$0xf] %v862
    // Predicated region
    $region30: #{tpu_custom_call.1} parent=1 // pred_check
      _
    $region31: #{tpu_custom_call.1} parent=1 // pred_check_branch
      %868 = sbr.rel (0) target = $region33
    $region32: #{tpu_custom_call.1} parent=1 // pred_region
      %s870 = ssub.s32 256, 256
      %871 = vsyncadd [#allocation4], %s870
      %s872 = sshll.u32 [#allocation8], 4
      %s873 = int_to_ptr.vmem [resolvable:$true] %s872
      %878 = dma.vmem_to_hbm [thread:$0]  %s873, 256, %s4, [#allocation4], 128, 128, 8
    $region33: #{tpu_custom_call.1} parent=1 // pred_fallthru
      _
    // Predicated region
    $region34: #{tpu_custom_call.1} parent=1 // pred_check
      _
    $region35: #{tpu_custom_call.1} parent=1 // pred_check_branch
      %880 = sbr.rel (0) target = $region37
    $region36: #{tpu_custom_call.1} parent=1 // pred_region
      %881 = dma.done [#allocation4], 256
    $region37: #{tpu_custom_call.1} parent=1 // pred_fallthru
      _
    %882 = vsyncpa [#allocation3], 1
    %883 = vsyncpa [#allocation6], 1
    %884 = vsyncpa [#allocation4], 1

</llo_original>
